<compile_context>
chip_gen: v7x
topology: tpu7x:2x2x1
jax: 0.10.0
libtpu: 0.0.40
codegen_flags: <defaults>
</compile_context>

<pallas_src>
import functools
import math

import jax
import jax.numpy as jnp
import numpy as np
from jax.experimental import pallas as pl
from jax.experimental.pallas import tpu as pltpu


_TM = 256  # GEMM row-tile (multiple of 8; small shapes fall back to a single full tile)


def _round_up(x, m):
    return (x + m - 1) // m * m


# --------------------------------------------------------------------------------------
# Fused conv-as-GEMM kernel:  out = relu( patches @ W * scale + bias (+ residual) )
# --------------------------------------------------------------------------------------
def _conv_gemm_kernel(p_ref, w_ref, s_ref, b_ref, *rest, apply_relu, has_residual):
    out_ref = rest[-1]
    acc = jnp.dot(p_ref[...], w_ref[...], preferred_element_type=jnp.float32)
    y = acc * s_ref[...] + b_ref[...]            # folded inference BatchNorm
    if has_residual:
        y = y + rest[0][...]
    if apply_relu:
        y = jnp.maximum(y, 0.0)
    out_ref[...] = y.astype(out_ref.dtype)


def conv2d_bn_act(x, w, scale, bias, *, stride, padding, relu, residual=None):
    """x: (B,H,W,Cin) f32, w: (KH,KW,Cin,Cout).  Returns (B,Ho,Wo,Cout) f32."""
    B, H, W, Cin = x.shape
    KH, KW, _, Cout = w.shape
    Ho = (H + 2 * padding - KH) // stride + 1
    Wo = (W + 2 * padding - KW) // stride + 1

    # ---- layout plumbing only (pad + im2col); all FLOPs happen in the Pallas kernel ----
    xp = jnp.pad(x, ((0, 0), (padding, padding), (padding, padding), (0, 0)))
    cols = []
    for dy in range(KH):
        for dx in range(KW):
            win = jax.lax.slice(
                xp,
                (0, dy, dx, 0),
                (B, dy + stride * (Ho - 1) + 1, dx + stride * (Wo - 1) + 1, Cin),
                (1, stride, stride, 1))
            cols.append(win)                                    # (B,Ho,Wo,Cin)
    patches = jnp.concatenate(cols, axis=-1).reshape(B * Ho * Wo, KH * KW * Cin)
    w_flat = w.reshape(KH * KW * Cin, Cout).astype(jnp.float32)

    M = B * Ho * Wo
    K = KH * KW * Cin
    m_pad8 = _round_up(M, 8)
    if m_pad8 <= _TM:
        tm, m_pad = m_pad8, m_pad8
    else:
        tm, m_pad = _TM, _round_up(M, _TM)
    if m_pad != M:
        patches = jnp.pad(patches, ((0, m_pad - M), (0, 0)))
    n_tiles = m_pad // tm

    scale2 = scale.reshape(1, Cout).astype(jnp.float32)
    bias2 = bias.reshape(1, Cout).astype(jnp.float32)

    in_specs = [
        pl.BlockSpec((tm, K), lambda i: (i, 0)),      # patch rows: tiled / pipelined
        pl.BlockSpec((K, Cout), lambda i: (0, 0)),    # weights: resident
        pl.BlockSpec((1, Cout), lambda i: (0, 0)),    # folded BN scale: resident
        pl.BlockSpec((1, Cout), lambda i: (0, 0)),    # folded BN bias: resident
    ]
    args = [patches, w_flat, scale2, bias2]
    if residual is not None:
        res = residual.reshape(M, Cout).astype(jnp.float32)
        if m_pad != M:
            res = jnp.pad(res, ((0, m_pad - M), (0, 0)))
        in_specs.append(pl.BlockSpec((tm, Cout), lambda i: (i, 0)))
        args.append(res)

    kernel = functools.partial(_conv_gemm_kernel,
                               apply_relu=relu,
                               has_residual=residual is not None)
    out = pl.pallas_call(
        kernel,
        out_shape=jax.ShapeDtypeStruct((m_pad, Cout), jnp.float32),
        grid=(n_tiles,),
        in_specs=in_specs,
        out_specs=pl.BlockSpec((tm, Cout), lambda i: (i, 0)),
        compiler_params=pltpu.CompilerParams(dimension_semantics=("parallel",)),
    )(*args)
    return out[:M].reshape(B, Ho, Wo, Cout)


# --------------------------------------------------------------------------------------
# AvgPool2d((1, pool)) over the W (last spatial) axis, NHWC.
# --------------------------------------------------------------------------------------
def _avgpool_w_kernel(x_ref, o_ref, *, pool, n_out):
    inv = 1.0 / float(pool)
    for j in range(n_out):
        acc = x_ref[:, :, j * pool:j * pool + 1, :]
        for t in range(1, pool):
            acc = acc + x_ref[:, :, j * pool + t:j * pool + t + 1, :]
        o_ref[:, :, j:j + 1, :] = acc * inv


def avgpool_w(x, pool):
    B, H, W, C = x.shape
    n_out = W // pool
    kernel = functools.partial(_avgpool_w_kernel, pool=pool, n_out=n_out)
    return pl.pallas_call(
        kernel,
        out_shape=jax.ShapeDtypeStruct((B, H, n_out, C), jnp.float32),
        grid=(1,),
        in_specs=[pl.BlockSpec((B, H, W, C), lambda i: (0, 0, 0, 0))],
        out_specs=pl.BlockSpec((B, H, n_out, C), lambda i: (0, 0, 0, 0)),
    )(x)


# --------------------------------------------------------------------------------------
# Parameters (BasicBlock ResNet, expansion = 1, as built by the PyTorch module)
# --------------------------------------------------------------------------------------
def _init_conv(key, kh, kw, cin, cout):
    std = math.sqrt(2.0 / (kh * kw * cin))
    return jax.random.normal(key, (kh, kw, cin, cout), jnp.float32) * std


def _init_bn(key, c):
    k1, k2, k3, k4 = jax.random.split(key, 4)
    return dict(
        gamma=1.0 + 0.1 * jax.random.normal(k1, (c,), jnp.float32),
        beta=0.1 * jax.random.normal(k2, (c,), jnp.float32),
        mean=0.1 * jax.random.normal(k3, (c,), jnp.float32),
        var=1.0 + 0.2 * jax.random.uniform(k4, (c,), jnp.float32),
    )


def _fold_bn(bn, eps=1e-5):
    scale = bn['gamma'] / jnp.sqrt(bn['var'] + eps)
    bias = bn['beta'] - bn['mean'] * scale
    return scale, bias


_LAYERS = (('layer1', 16, 1), ('layer2', 32, 2), ('layer3', 64, 2), ('layer4', 128, 2))


def make_resnet_params(key, layers=(1, 1, 1, 1)):
    keys = iter(jax.random.split(key, 128))
    params = {'conv1': _init_conv(next(keys), 7, 7, 1, 16), 'bn1': _init_bn(next(keys), 16)}
    inplanes = 16
    for (name, planes, stride), n_blocks in zip(_LAYERS, layers):
        blks = []
        for b in range(n_blocks):
            st = stride if b == 0 else 1
            blk = {
                'stride': st,
                'conv1': _init_conv(next(keys), 3, 3, inplanes, planes),
                'bn1': _init_bn(next(keys), planes),
                'conv2': _init_conv(next(keys), 3, 3, planes, planes),
                'bn2': _init_bn(next(keys), planes),
                'downsample': None,
            }
            if st != 1 or inplanes != planes:
                blk['downsample'] = {'conv': _init_conv(next(keys), 1, 1, inplanes, planes),
                                     'bn': _init_bn(next(keys), planes)}
            blks.append(blk)
            inplanes = planes
        params[name] = blks
    return params


# --------------------------------------------------------------------------------------
# Full forward pass (Pallas) and a pure-JAX reference
# --------------------------------------------------------------------------------------
def resnet_forward_pallas(params, x):
    h = x[..., None]                                  # (B,H,W) -> NHWC with Cin=1
    s, b = _fold_bn(params['bn1'])
    h = conv2d_bn_act(h, params['conv1'], s, b, stride=1, padding=3, relu=True)
    for name, _, _ in _LAYERS:
        for blk in params[name]:
            identity = h
            st = blk['stride']
            s1, b1 = _fold_bn(blk['bn1'])
            y = conv2d_bn_act(h, blk['conv1'], s1, b1, stride=st, padding=1, relu=True)
            if blk['downsample'] is not None:
                sd, bd = _fold_bn(blk['downsample']['bn'])
                identity = conv2d_bn_act(h, blk['downsample']['conv'], sd, bd,
                                         stride=st, padding=0, relu=False)
            s2, b2 = _fold_bn(blk['bn2'])
            h = conv2d_bn_act(y, blk['conv2'], s2, b2, stride=1, padding=1,
                              relu=True, residual=identity)
    B, H4, W4, C = h.shape
    pooled = avgpool_w(h, pool=3)                     # (B, H4, W4//3, C); W4//3 == 1 here
    # torch: view(B, C, H').permute(0, 2, 1)  ->  (B, H', C)
    return pooled.reshape(B, H4, C)


def _conv_ref(x, w, stride, padding):
    return jax.lax.conv_general_dilated(
        x, w, window_strides=(stride, stride),
        padding=[(padding, padding), (padding, padding)],
        dimension_numbers=('NHWC', 'HWIO', 'NHWC'),
        precision=jax.lax.Precision.HIGHEST)


def resnet_forward_ref(params, x):
    def bn(h, p):
        s, b = _fold_bn(p)
        return h * s + b

    h = x[..., None]
    h = jax.nn.relu(bn(_conv_ref(h, params['conv1'], 1, 3), params['bn1']))
    for name, _, _ in _LAYERS:
        for blk in params[name]:
            identity = h
            st = blk['stride']
            y = jax.nn.relu(bn(_conv_ref(h, blk['conv1'], st, 1), blk['bn1']))
            if blk['downsample'] is not None:
                identity = bn(_conv_ref(h, blk['downsample']['conv'], st, 0),
                              blk['downsample']['bn'])
            h = jax.nn.relu(bn(_conv_ref(y, blk['conv2'], 1, 1), blk['bn2']) + identity)
    B, H4, W4, C = h.shape
    pooled = jnp.mean(h.reshape(B, H4, W4 // 3, 3, C), axis=3)
    return pooled[:, :, 0, :]


if __name__ == "__main__":
    key = jax.random.PRNGKey(0)
    kp, kx = jax.random.split(key)

    # Input (B, time, freq).  freq=24 shrinks 24 -> 12 -> 6 -> 3 through the strided
    # layers, and the AvgPool2d((1,3)) reduces it to 1 — required by the module's
    # trailing .view().  Small ResNet config: layers = (1, 1, 1, 1).
    B, T, F = 2, 32, 24
    x = jax.random.normal(kx, (B, T, F), jnp.float32)
    params = make_resnet_params(kp, layers=(1, 1, 1, 1))

    out = resnet_forward_pallas(params, x)
    out = jax.block_until_ready(out)
    assert out.shape == (B, T // 8, 128), out.shape

    ref = resnet_forward_ref(params, x)
    # Loose-ish tolerance covers possible MXU f32 pass-count differences between the
    # Pallas GEMM and the XLA convolution reference; real bugs are O(1) mismatches.
    np.testing.assert_allclose(np.asarray(out), np.asarray(ref), rtol=5e-2, atol=5e-2)

    print("KERNEL_OK")
</pallas_src>

<mosaic_0001>
module attributes {stable_mosaic.version = 11 : i64} {
  func.func @_conv_gemm_kernel(%arg0: i32, %arg1: memref<256x49xf32, #tpu.memory_space<vmem>>, %arg2: memref<49x16xf32, #tpu.memory_space<vmem>>, %arg3: memref<1x16xf32, #tpu.memory_space<vmem>>, %arg4: memref<1x16xf32, #tpu.memory_space<vmem>>, %arg5: memref<256x16xf32, #tpu.memory_space<vmem>>) attributes {dimension_semantics = [#tpu.dimension_semantics<parallel>], iteration_bounds = array<i64: 6>, scalar_prefetch = 0 : i64, scratch_operands = 0 : i64, tpu.core_type = #tpu.core_type<tc>, window_params = [{transform_indices = @transform_0, window_bounds = array<i64: 256, 49>}, {pipeline_mode = #tpu.pipeline_mode<synchronous>, transform_indices = @transform_1, window_bounds = array<i64: 49, 16>}, {pipeline_mode = #tpu.pipeline_mode<synchronous>, transform_indices = @transform_2, window_bounds = array<i64: 1, 16>}, {pipeline_mode = #tpu.pipeline_mode<synchronous>, transform_indices = @transform_3, window_bounds = array<i64: 1, 16>}, {transform_indices = @transform_4, window_bounds = array<i64: 256, 16>}]} {
    %c0 = arith.constant 0 : index
    %c0_0 = arith.constant 0 : index
    %0 = vector.load %arg1[%c0, %c0_0] : memref<256x49xf32, #tpu.memory_space<vmem>>, vector<256x49xf32>
    %c0_1 = arith.constant 0 : index
    %c0_2 = arith.constant 0 : index
    %1 = vector.load %arg2[%c0_1, %c0_2] : memref<49x16xf32, #tpu.memory_space<vmem>>, vector<49x16xf32>
    %cst = arith.constant dense<0.000000e+00> : vector<256x16xf32>
    %2 = tpu.matmul %0, %1, %cst {dimension_numbers = #tpu.dot_dimension_numbers<[1], [0], [0], [1], [0, 0, 1, 1], [], []>} : vector<256x49xf32>, vector<49x16xf32>, vector<256x16xf32> -> vector<256x16xf32>
    %c0_3 = arith.constant 0 : index
    %c0_4 = arith.constant 0 : index
    %3 = vector.load %arg3[%c0_3, %c0_4] : memref<1x16xf32, #tpu.memory_space<vmem>>, vector<1x16xf32>
    %4 = vector.broadcast %3 : vector<1x16xf32> to vector<256x16xf32>
    %5 = arith.mulf %2, %4 : vector<256x16xf32>
    %c0_5 = arith.constant 0 : index
    %c0_6 = arith.constant 0 : index
    %6 = vector.load %arg4[%c0_5, %c0_6] : memref<1x16xf32, #tpu.memory_space<vmem>>, vector<1x16xf32>
    %7 = vector.broadcast %6 : vector<1x16xf32> to vector<256x16xf32>
    %8 = arith.addf %5, %7 : vector<256x16xf32>
    %cst_7 = arith.constant 0.000000e+00 : f32
    %9 = vector.broadcast %cst_7 : f32 to vector<256x16xf32>
    %10 = arith.maximumf %8, %9 : vector<256x16xf32>
    %c0_8 = arith.constant 0 : index
    %c0_9 = arith.constant 0 : index
    %11 = vector.load %arg5[%c0_8, %c0_9] : memref<256x16xf32, #tpu.memory_space<vmem>>, vector<256x16xf32>
    tpu.vector_store %arg5[%c0_8, %c0_9], %10 {strides = array<i32>} : memref<256x16xf32, #tpu.memory_space<vmem>>, vector<256x16xf32>,
    return
  }
  func.func @transform_0(%arg0: i32) -> (i32, i32) {
    %c0_i32 = arith.constant 0 : i32
    %c0_i32_0 = arith.constant 0 : i32
    return %arg0, %c0_i32 : i32, i32
  }
  func.func @transform_1(%arg0: i32) -> (i32, i32) {
    %c0_i32 = arith.constant 0 : i32
    %c0_i32_0 = arith.constant 0 : i32
    %c0_i32_1 = arith.constant 0 : i32
    return %c0_i32, %c0_i32_0 : i32, i32
  }
  func.func @transform_2(%arg0: i32) -> (i32, i32) {
    %c0_i32 = arith.constant 0 : i32
    %c0_i32_0 = arith.constant 0 : i32
    %c0_i32_1 = arith.constant 0 : i32
    return %c0_i32, %c0_i32_0 : i32, i32
  }
  func.func @transform_3(%arg0: i32) -> (i32, i32) {
    %c0_i32 = arith.constant 0 : i32
    %c0_i32_0 = arith.constant 0 : i32
    %c0_i32_1 = arith.constant 0 : i32
    return %c0_i32, %c0_i32_0 : i32, i32
  }
  func.func @transform_4(%arg0: i32) -> (i32, i32) {
    %c0_i32 = arith.constant 0 : i32
    %c0_i32_0 = arith.constant 0 : i32
    return %arg0, %c0_i32 : i32, i32
  }
}

</mosaic_0001>

<llo_original>
// kernel: tpu_custom_call.1
$region0: #{tpu_custom_call.1}
  #allocation0 [shape = 'u32[]', space=smem, size = 0x4, offset = 0x4, fixed_abs, tag = 'smem constant byte address 0x4 - core index']
  #allocation1 [shape = 'u32[144,128]{1,0:T(1,128)}', space=vmem, size = 0x12000, scoped, tag = 'internal scratch']
  %s0 = inlined_call_operand.vmem [shape: f32[1536,49], index: 0, kind: input, shape index: {}]
  %s1 = inlined_call_operand.vmem [shape: f32[49,16], index: 1, kind: input, shape index: {}]
  %s2 = inlined_call_operand.vmem [shape: f32[1,16], index: 2, kind: input, shape index: {}]
  %s3 = inlined_call_operand.vmem [shape: f32[1,16], index: 3, kind: input, shape index: {}]
  %s4 = inlined_call_operand.vmem [shape: f32[1536,16], index: 4, kind: output, shape index: {}]
  %s5 = sld [smem:[#allocation0]]
  $region49: #{tpu_custom_call.1} parent=0
    _
  %s7 = ssub.s32 1, %s5
  %s8 = scalar_select 0, %s7, %s5
  loop: start=0, step=1, limit=8
  $region2: #{tpu_custom_call.1} parent=0 // loop_pre_header
    _
  $region3: #{tpu_custom_call.1} parent=0 // loop_header
    %s10 = sphi 0, %s14
    %p11 = scmp.ge.s32.totalorder %s10, 8
    %s20 = sphi 0, %s22
    %s23 = sphi 0, %s20
    %s24 = sphi 0, %s23
    %s40 = sphi 0, %s24
    %s44 = sphi 0, %s44
    %s46 = sphi 0, %s44
    %s47 = sphi 0, %s46
    %s61 = sphi 0, %s47
    %s65 = sphi 0, %s65
    %s67 = sphi 0, %s65
    %s68 = sphi 0, %s67
    %s82 = sphi 0, %s68
    %s86 = sphi 0, %s86
    %s88 = sphi 0, %s86
    %s89 = sphi 0, %s88
    %s103 = sphi 0, %s89
    %s109 = sphi 0, %s111
    %s112 = sphi 0, %s109
    %s113 = sphi 0, %s112
    %s129 = sphi 0, %s113
  $region4: #{tpu_custom_call.1} parent=0 // loop_header_branch
    %13 = sbr.rel (%p11) target = $region8
  $region5: #{tpu_custom_call.1} parent=0 // loop_body
    %s15 = ssub.s32 %s10, 1
    %s16 = ssub.s32 %s10, 2
    %s17 = sadd.s32 %s10, 1
    %s18 = ssub.s32 %s10, %s17
    %p19 = scmp.eq.s32.totalorder %s18, 0
    %s21 = sadd.s32 %s20, 1
    %s22 = scalar_select %p19, %s20, %s21
    %p25 = pneg %p19
    %p26 = scmp.eq.s32.totalorder %s10, 5
    %p27 = por %p25, %p26
    %p28 = scmp.ne.s32.totalorder %s20, %s23
    %p29 = scmp.eq.s32.totalorder %s10, 0
    %p30 = por %p28, %p29
    %p31 = scmp.ne.s32.totalorder %s20, %s23
    %p32 = scmp.eq.s32.totalorder %s15, 5
    %p33 = por %p31, %p32
    %p34 = scmp.ne.s32.totalorder %s23, %s24
    %p35 = scmp.eq.s32.totalorder %s15, 0
    %p36 = por %p34, %p35
    %p37 = scmp.ne.s32.totalorder %s23, %s24
    %p38 = scmp.eq.s32.totalorder %s16, 5
    %p39 = por %p37, %p38
    %p41 = scmp.ne.s32.totalorder %s24, %s40
    %p42 = scmp.eq.s32.totalorder %s16, 0
    %p43 = por %p41, %p42
    %s45 = sadd.s32 %s44, 1
    %p48 = scmp.eq.s32.totalorder %s10, 5
    %p49 = scmp.ne.s32.totalorder %s44, %s46
    %p50 = scmp.eq.s32.totalorder %s10, 0
    %p51 = por %p49, %p50
    %p52 = scmp.ne.s32.totalorder %s44, %s46
    %p53 = scmp.eq.s32.totalorder %s15, 5
    %p54 = por %p52, %p53
    %p55 = scmp.ne.s32.totalorder %s46, %s47
    %p56 = scmp.eq.s32.totalorder %s15, 0
    %p57 = por %p55, %p56
    %p58 = scmp.ne.s32.totalorder %s46, %s47
    %p59 = scmp.eq.s32.totalorder %s16, 5
    %p60 = por %p58, %p59
    %p62 = scmp.ne.s32.totalorder %s47, %s61
    %p63 = scmp.eq.s32.totalorder %s16, 0
    %p64 = por %p62, %p63
    %s66 = sadd.s32 %s65, 1
    %p69 = scmp.eq.s32.totalorder %s10, 5
    %p70 = scmp.ne.s32.totalorder %s65, %s67
    %p71 = scmp.eq.s32.totalorder %s10, 0
    %p72 = por %p70, %p71
    %p73 = scmp.ne.s32.totalorder %s65, %s67
    %p74 = scmp.eq.s32.totalorder %s15, 5
    %p75 = por %p73, %p74
    %p76 = scmp.ne.s32.totalorder %s67, %s68
    %p77 = scmp.eq.s32.totalorder %s15, 0
    %p78 = por %p76, %p77
    %p79 = scmp.ne.s32.totalorder %s67, %s68
    %p80 = scmp.eq.s32.totalorder %s16, 5
    %p81 = por %p79, %p80
    %p83 = scmp.ne.s32.totalorder %s68, %s82
    %p84 = scmp.eq.s32.totalorder %s16, 0
    %p85 = por %p83, %p84
    %s87 = sadd.s32 %s86, 1
    %p90 = scmp.eq.s32.totalorder %s10, 5
    %p91 = scmp.ne.s32.totalorder %s86, %s88
    %p92 = scmp.eq.s32.totalorder %s10, 0
    %p93 = por %p91, %p92
    %p94 = scmp.ne.s32.totalorder %s86, %s88
    %p95 = scmp.eq.s32.totalorder %s15, 5
    %p96 = por %p94, %p95
    %p97 = scmp.ne.s32.totalorder %s88, %s89
    %p98 = scmp.eq.s32.totalorder %s15, 0
    %p99 = por %p97, %p98
    %p100 = scmp.ne.s32.totalorder %s88, %s89
    %p101 = scmp.eq.s32.totalorder %s16, 5
    %p102 = por %p100, %p101
    %p104 = scmp.ne.s32.totalorder %s89, %s103
    %p105 = scmp.eq.s32.totalorder %s16, 0
    %p106 = por %p104, %p105
    %s107 = ssub.s32 %s10, %s17
    %p108 = scmp.eq.s32.totalorder %s107, 0
    %s110 = sadd.s32 %s109, 1
    %s111 = scalar_select %p108, %s109, %s110
    %p114 = pneg %p108
    %p115 = scmp.eq.s32.totalorder %s10, 5
    %p116 = por %p114, %p115
    %p117 = scmp.ne.s32.totalorder %s109, %s112
    %p118 = scmp.eq.s32.totalorder %s10, 0
    %p119 = por %p117, %p118
    %p120 = scmp.ne.s32.totalorder %s109, %s112
    %p121 = scmp.eq.s32.totalorder %s15, 5
    %p122 = por %p120, %p121
    %p123 = scmp.ne.s32.totalorder %s112, %s113
    %p124 = scmp.eq.s32.totalorder %s15, 0
    %p125 = por %p123, %p124
    %p126 = scmp.ne.s32.totalorder %s112, %s113
    %p127 = scmp.eq.s32.totalorder %s16, 5
    %p128 = por %p126, %p127
    %p130 = scmp.ne.s32.totalorder %s113, %s129
    %p131 = scmp.eq.s32.totalorder %s16, 0
    %p132 = por %p130, %p131
    %p133 = scmp.le.s32.totalorder 1, %s10
    %p134 = scmp.lt.s32.totalorder %s10, 7
    %p135 = pnand %p133, %p134
    %p136 = pneg %p135
    // Predicated region
    $region9: #{tpu_custom_call.1} parent=5 // pred_check
      _
    $region10: #{tpu_custom_call.1} parent=5 // pred_check_branch
      %138 = sbr.rel (%p135) target = $region12
    $region11: #{tpu_custom_call.1} parent=5 // pred_region
      %s139 = ssub.s32 %s10, 1
      // Predicated region
      $region13: #{tpu_custom_call.1} parent=11 // pred_check
        %p140 = pneg %p57
      $region14: #{tpu_custom_call.1} parent=11 // pred_check_branch
        %142 = sbr.rel (%p140) target = $region16
      $region15: #{tpu_custom_call.1} parent=11 // pred_region
        _
      $region16: #{tpu_custom_call.1} parent=11 // pred_fallthru
        _
      // Predicated region
      $region17: #{tpu_custom_call.1} parent=11 // pred_check
        %p143 = pneg %p78
      $region18: #{tpu_custom_call.1} parent=11 // pred_check_branch
        %145 = sbr.rel (%p143) target = $region20
      $region19: #{tpu_custom_call.1} parent=11 // pred_region
        _
      $region20: #{tpu_custom_call.1} parent=11 // pred_fallthru
        _
      // Predicated region
      $region21: #{tpu_custom_call.1} parent=11 // pred_check
        %p146 = pneg %p99
      $region22: #{tpu_custom_call.1} parent=11 // pred_check_branch
        %148 = sbr.rel (%p146) target = $region24
      $region23: #{tpu_custom_call.1} parent=11 // pred_region
        _
      $region24: #{tpu_custom_call.1} parent=11 // pred_fallthru
        _
    $region12: #{tpu_custom_call.1} parent=5 // pred_fallthru
      _
    %p149 = scmp.lt.s32.totalorder %s10, 6
    // Predicated region
    $region25: #{tpu_custom_call.1} parent=5 // pred_check
      %p150 = pneg %p149
    $region26: #{tpu_custom_call.1} parent=5 // pred_check_branch
      %152 = sbr.rel (%p150) target = $region28
    $region27: #{tpu_custom_call.1} parent=5 // pred_region
      // Predicated region
      $region29: #{tpu_custom_call.1} parent=27 // pred_check
        %p153 = pneg %p30
      $region30: #{tpu_custom_call.1} parent=27 // pred_check_branch
        %155 = sbr.rel (%p153) target = $region32
      $region31: #{tpu_custom_call.1} parent=27 // pred_region
        %s156 = smul.u32 32, %s10
        %p157 = scmp.lt.s32.totalorder %s156, 191
        %s158 = scalar_select %p157, %s156, 191
        %s159 = smul.addr %s158, 8
        %s160 = scalar_lea.vmem %s0, %s159
        %s161 = smul.u32 32, %s10
      $region32: #{tpu_custom_call.1} parent=27 // pred_fallthru
        _
    $region28: #{tpu_custom_call.1} parent=5 // pred_fallthru
      _
    %p162 = scmp.le.s32.totalorder 1, %s10
    %p163 = scmp.lt.s32.totalorder %s10, 7
    %p164 = pnand %p162, %p163
    %p165 = pneg %p164
    // Predicated region
    $region33: #{tpu_custom_call.1} parent=5 // pred_check
      _
    $region34: #{tpu_custom_call.1} parent=5 // pred_check_branch
      %167 = sbr.rel (%p164) target = $region36
    $region35: #{tpu_custom_call.1} parent=5 // pred_region
      %s168 = ssub.s32 %s10, 1
      %s169 = smul.u32 32, %s15
      %p170 = scmp.lt.s32.totalorder %s169, 191
      %s171 = scalar_select %p170, %s169, 191
      %s172 = smul.addr %s171, 8
      %s173 = scalar_lea.vmem %s0, %s172
      %p174 = pneg %p36
      %p175 = pneg %p33
      %p176 = pneg %p57
      %p177 = pneg %p54
      %p178 = pneg %p78
      %p179 = pneg %p75
      %p180 = pneg %p99
      %p181 = pneg %p96
      %p182 = pneg %p125
      %p183 = pneg %p122
      %s184 = smul.u32 32, %s15
      %p185 = scmp.lt.s32.totalorder %s184, 191
      %s186 = scalar_select %p185, %s184, 191
      %s187 = smul.addr %s186, 8
      %s188 = scalar_lea.vmem %s4, %s187
      %s189 = smul.u32 32, %s15
      %p190 = scmp.lt.s32.totalorder %s189, 191
      %s191 = scalar_select %p190, %s189, 191
      %s192 = smul.addr %s191, 8
      %s193 = scalar_lea.vmem %s0, %s192
      %s194 = smul.u32 32, %s15
      %s195 = smul.u32 32, %s15
      %p196 = scmp.lt.s32.totalorder %s195, 191
      %s197 = scalar_select %p196, %s195, 191
      %s198 = smul.addr %s197, 8
      %s199 = scalar_lea.vmem %s4, %s198
      %s200 = smul.u32 32, %s15
      %v201 = vld [vmem:[%s193] sm:$0xff]
      %v202 = vld [vmem:[%s193 + $0x8] sm:$0xff]
      %v203 = vld [vmem:[%s193 + $0x10] sm:$0xff]
      %v204 = vld [vmem:[%s193 + $0x18] sm:$0xff]
      %v205 = vld [vmem:[%s193 + $0x20] sm:$0xff]
      %v206 = vld [vmem:[%s193 + $0x28] sm:$0xff]
      %v207 = vld [vmem:[%s193 + $0x30] sm:$0xff]
      %v208 = vld [vmem:[%s193 + $0x38] sm:$0xff]
      %v209 = vld [vmem:[%s193 + $0x40] sm:$0xff]
      %v210 = vld [vmem:[%s193 + $0x48] sm:$0xff]
      %v211 = vld [vmem:[%s193 + $0x50] sm:$0xff]
      %v212 = vld [vmem:[%s193 + $0x58] sm:$0xff]
      %v213 = vld [vmem:[%s193 + $0x60] sm:$0xff]
      %v214 = vld [vmem:[%s193 + $0x68] sm:$0xff]
      %v215 = vld [vmem:[%s193 + $0x70] sm:$0xff]
      %v216 = vld [vmem:[%s193 + $0x78] sm:$0xff]
      %v217 = vld [vmem:[%s193 + $0x80] sm:$0xff]
      %v218 = vld [vmem:[%s193 + $0x88] sm:$0xff]
      %v219 = vld [vmem:[%s193 + $0x90] sm:$0xff]
      %v220 = vld [vmem:[%s193 + $0x98] sm:$0xff]
      %v221 = vld [vmem:[%s193 + $0xa0] sm:$0xff]
      %v222 = vld [vmem:[%s193 + $0xa8] sm:$0xff]
      %v223 = vld [vmem:[%s193 + $0xb0] sm:$0xff]
      %v224 = vld [vmem:[%s193 + $0xb8] sm:$0xff]
      %v225 = vld [vmem:[%s193 + $0xc0] sm:$0xff]
      %v226 = vld [vmem:[%s193 + $0xc8] sm:$0xff]
      %v227 = vld [vmem:[%s193 + $0xd0] sm:$0xff]
      %v228 = vld [vmem:[%s193 + $0xd8] sm:$0xff]
      %v229 = vld [vmem:[%s193 + $0xe0] sm:$0xff]
      %v230 = vld [vmem:[%s193 + $0xe8] sm:$0xff]
      %v231 = vld [vmem:[%s193 + $0xf0] sm:$0xff]
      %v232 = vld [vmem:[%s193 + $0xf8] sm:$0xff]
      %v233 = vld [vmem:[%s1] sm:$0xff]
      %v234 = vld [vmem:[%s1 + $0x8] sm:$0xff]
      %v235 = vld [vmem:[%s1 + $0x10] sm:$0xff]
      %v236 = vld [vmem:[%s1 + $0x18] sm:$0xff]
      %v237 = vld [vmem:[%s1 + $0x20] sm:$0xff]
      %v238 = vld [vmem:[%s1 + $0x28] sm:$0xff]
      %v239 = vld [vmem:[%s1 + $0x30] sm:$0x1]
      %vm240 = vcmask 400384
      %v242 = vsel %vm240, %v201, 0
      %v245 = vsel %vm240, %v202, 0
      %v248 = vsel %vm240, %v203, 0
      %v251 = vsel %vm240, %v204, 0
      %v254 = vsel %vm240, %v205, 0
      %v257 = vsel %vm240, %v206, 0
      %v260 = vsel %vm240, %v207, 0
      %v263 = vsel %vm240, %v208, 0
      %v266 = vsel %vm240, %v209, 0
      %v269 = vsel %vm240, %v210, 0
      %v272 = vsel %vm240, %v211, 0
      %v275 = vsel %vm240, %v212, 0
      %v278 = vsel %vm240, %v213, 0
      %v281 = vsel %vm240, %v214, 0
      %v284 = vsel %vm240, %v215, 0
      %v287 = vsel %vm240, %v216, 0
      %v290 = vsel %vm240, %v217, 0
      %v293 = vsel %vm240, %v218, 0
      %v296 = vsel %vm240, %v219, 0
      %v299 = vsel %vm240, %v220, 0
      %v302 = vsel %vm240, %v221, 0
      %v305 = vsel %vm240, %v222, 0
      %v308 = vsel %vm240, %v223, 0
      %v311 = vsel %vm240, %v224, 0
      %v314 = vsel %vm240, %v225, 0
      %v317 = vsel %vm240, %v226, 0
      %v320 = vsel %vm240, %v227, 0
      %v323 = vsel %vm240, %v228, 0
      %v326 = vsel %vm240, %v229, 0
      %v329 = vsel %vm240, %v230, 0
      %v332 = vsel %vm240, %v231, 0
      %v335 = vsel %vm240, %v232, 0
      %vm337 = vcmask 1040384
      %v339 = vsel %vm337, %v239, 0
      %341 = vmatprep.subr.mxu0 0.0
      %342 = vmatpush1.msra.mxu0 %v233
      %343 = vmatprep.subr.mxu0 0.0
      %344 = vmatpush1.msra.mxu0 %v234
      %345 = vmatprep.subr.mxu0 0.0
      %346 = vmatpush1.msra.mxu0 %v235
      %347 = vmatprep.subr.mxu0 0.0
      %348 = vmatpush1.msra.mxu0 %v236
      %349 = vmatprep.subr.mxu0 0.0
      %350 = vmatpush1.msra.mxu0 %v237
      %351 = vmatprep.subr.mxu0 0.0
      %352 = vmatpush1.msra.mxu0 %v238
      %353 = vmatprep.subr.mxu0 0.0
      %354 = vmatpush1.msra.mxu0 %v339
      %355 = vmatprep.subr.mxu0 0.0
      %356 = vmatpush1.msra.mxu0 0.0
      %357 = vmatprep.subr.mxu0 0.0
      %358 = vmatpush1.msra.mxu0 0.0
      %359 = vmatprep.subr.mxu0 0.0
      %360 = vmatpush1.msra.mxu0 0.0
      %361 = vmatprep.subr.mxu0 0.0
      %362 = vmatpush1.msra.mxu0 0.0
      %363 = vmatprep.subr.mxu0 0.0
      %364 = vmatpush1.msra.mxu0 0.0
      %365 = vmatprep.subr.mxu0 0.0
      %366 = vmatpush1.msra.mxu0 0.0
      %367 = vmatprep.subr.mxu0 0.0
      %368 = vmatpush1.msra.mxu0 0.0
      %369 = vmatprep.subr.mxu0 0.0
      %370 = vmatpush1.msra.mxu0 0.0
      %371 = vmatprep.subr.mxu0 0.0
      %372 = vmatpush1.msra.mxu0 0.0
      %373 = vmatprep.subr.mxu0 0.0
      %374 = vmatpush1.msra.mxu0 0.0
      %375 = vmatprep.subr.mxu0 0.0
      %376 = vmatpush1.msra.mxu0 0.0
      %377 = vmatprep.subr.mxu0 0.0
      %378 = vmatpush1.msra.mxu0 0.0
      %379 = vmatprep.subr.mxu0 0.0
      %380 = vmatpush1.msra.mxu0 0.0
      %381 = vmatprep.subr.mxu0 0.0
      %382 = vmatpush1.msra.mxu0 0.0
      %383 = vmatprep.subr.mxu0 0.0
      %384 = vmatpush1.msra.mxu0 0.0
      %385 = vmatprep.subr.mxu0 0.0
      %386 = vmatpush1.msra.mxu0 0.0
      %387 = vmatprep.subr.mxu0 0.0
      %388 = vmatpush1.msra.mxu0 0.0
      %389 = vmatprep.subr.mxu0 0.0
      %390 = vmatpush1.msra.mxu0 0.0
      %391 = vmatprep.subr.mxu0 0.0
      %392 = vmatpush1.msra.mxu0 0.0
      %393 = vmatprep.subr.mxu0 0.0
      %394 = vmatpush1.msra.mxu0 0.0
      %395 = vmatprep.subr.mxu0 0.0
      %396 = vmatpush1.msra.mxu0 0.0
      %397 = vmatprep.subr.mxu0 0.0
      %398 = vmatpush1.msra.mxu0 0.0
      %399 = vmatprep.subr.mxu0 0.0
      %400 = vmatpush1.msra.mxu0 0.0
      %401 = vmatprep.subr.mxu0 0.0
      %402 = vmatpush1.msra.mxu0 0.0
      %403 = vmatprep.subr.mxu0 0.0
      %404 = vmatpush1.msra.mxu0 0.0
      %405 = vmatprep.mubr.f32.mxu0 0.0
      %406 = vmatmul.mubr.f32.gmra.mrb[0].mxu0 %v242
      %v407 = vpop.f32.mrb[0].mxu0
      %v408 = vadd.f32 0.0, %v407
      %v409 = vpop.f32.mrb[0].mxu0
      %410 = vmatprep.mubr.f32.mxu0 0.0
      %411 = vmatmul.mubr.f32.gmra.mrb[0].mxu0 %v245
      %v412 = vpop.f32.mrb[0].mxu0
      %v413 = vadd.f32 0.0, %v412
      %v414 = vpop.f32.mrb[0].mxu0
      %415 = vmatprep.mubr.f32.mxu0 0.0
      %416 = vmatmul.mubr.f32.gmra.mrb[0].mxu0 %v248
      %v417 = vpop.f32.mrb[0].mxu0
      %v418 = vadd.f32 0.0, %v417
      %v419 = vpop.f32.mrb[0].mxu0
      %420 = vmatprep.mubr.f32.mxu0 0.0
      %421 = vmatmul.mubr.f32.gmra.mrb[0].mxu0 %v251
      %v422 = vpop.f32.mrb[0].mxu0
      %v423 = vadd.f32 0.0, %v422
      %v424 = vpop.f32.mrb[0].mxu0
      %425 = vmatprep.mubr.f32.mxu0 0.0
      %426 = vmatmul.mubr.f32.gmra.mrb[0].mxu0 %v254
      %v427 = vpop.f32.mrb[0].mxu0
      %v428 = vadd.f32 0.0, %v427
      %v429 = vpop.f32.mrb[0].mxu0
      %430 = vmatprep.mubr.f32.mxu0 0.0
      %431 = vmatmul.mubr.f32.gmra.mrb[0].mxu0 %v257
      %v432 = vpop.f32.mrb[0].mxu0
      %v433 = vadd.f32 0.0, %v432
      %v434 = vpop.f32.mrb[0].mxu0
      %435 = vmatprep.mubr.f32.mxu0 0.0
      %436 = vmatmul.mubr.f32.gmra.mrb[0].mxu0 %v260
      %v437 = vpop.f32.mrb[0].mxu0
      %v438 = vadd.f32 0.0, %v437
      %v439 = vpop.f32.mrb[0].mxu0
      %440 = vmatprep.mubr.f32.mxu0 0.0
      %441 = vmatmul.mubr.f32.gmra.mrb[0].mxu0 %v263
      %v442 = vpop.f32.mrb[0].mxu0
      %v443 = vadd.f32 0.0, %v442
      %v444 = vpop.f32.mrb[0].mxu0
      %445 = vmatprep.mubr.f32.mxu0 0.0
      %446 = vmatmul.mubr.f32.gmra.mrb[0].mxu0 %v266
      %v447 = vpop.f32.mrb[0].mxu0
      %v448 = vadd.f32 0.0, %v447
      %v449 = vpop.f32.mrb[0].mxu0
      %450 = vmatprep.mubr.f32.mxu0 0.0
      %451 = vmatmul.mubr.f32.gmra.mrb[0].mxu0 %v269
      %v452 = vpop.f32.mrb[0].mxu0
      %v453 = vadd.f32 0.0, %v452
      %v454 = vpop.f32.mrb[0].mxu0
      %455 = vmatprep.mubr.f32.mxu0 0.0
      %456 = vmatmul.mubr.f32.gmra.mrb[0].mxu0 %v272
      %v457 = vpop.f32.mrb[0].mxu0
      %v458 = vadd.f32 0.0, %v457
      %v459 = vpop.f32.mrb[0].mxu0
      %460 = vmatprep.mubr.f32.mxu0 0.0
      %461 = vmatmul.mubr.f32.gmra.mrb[0].mxu0 %v275
      %v462 = vpop.f32.mrb[0].mxu0
      %v463 = vadd.f32 0.0, %v462
      %v464 = vpop.f32.mrb[0].mxu0
      %465 = vmatprep.mubr.f32.mxu0 0.0
      %466 = vmatmul.mubr.f32.gmra.mrb[0].mxu0 %v278
      %v467 = vpop.f32.mrb[0].mxu0
      %v468 = vadd.f32 0.0, %v467
      %v469 = vpop.f32.mrb[0].mxu0
      %470 = vmatprep.mubr.f32.mxu0 0.0
      %471 = vmatmul.mubr.f32.gmra.mrb[0].mxu0 %v281
      %v472 = vpop.f32.mrb[0].mxu0
      %v473 = vadd.f32 0.0, %v472
      %v474 = vpop.f32.mrb[0].mxu0
      %475 = vmatprep.mubr.f32.mxu0 0.0
      %476 = vmatmul.mubr.f32.gmra.mrb[0].mxu0 %v284
      %v477 = vpop.f32.mrb[0].mxu0
      %v478 = vadd.f32 0.0, %v477
      %v479 = vpop.f32.mrb[0].mxu0
      %480 = vmatprep.mubr.f32.mxu0 0.0
      %481 = vmatmul.mubr.f32.gmra.mrb[0].mxu0 %v287
      %v482 = vpop.f32.mrb[0].mxu0
      %v483 = vadd.f32 0.0, %v482
      %v484 = vpop.f32.mrb[0].mxu0
      %485 = vmatprep.mubr.f32.mxu0 0.0
      %486 = vmatmul.mubr.f32.gmra.mrb[0].mxu0 %v290
      %v487 = vpop.f32.mrb[0].mxu0
      %v488 = vadd.f32 0.0, %v487
      %v489 = vpop.f32.mrb[0].mxu0
      %490 = vmatprep.mubr.f32.mxu0 0.0
      %491 = vmatmul.mubr.f32.gmra.mrb[0].mxu0 %v293
      %v492 = vpop.f32.mrb[0].mxu0
      %v493 = vadd.f32 0.0, %v492
      %v494 = vpop.f32.mrb[0].mxu0
      %495 = vmatprep.mubr.f32.mxu0 0.0
      %496 = vmatmul.mubr.f32.gmra.mrb[0].mxu0 %v296
      %v497 = vpop.f32.mrb[0].mxu0
      %v498 = vadd.f32 0.0, %v497
      %v499 = vpop.f32.mrb[0].mxu0
      %500 = vmatprep.mubr.f32.mxu0 0.0
      %501 = vmatmul.mubr.f32.gmra.mrb[0].mxu0 %v299
      %v502 = vpop.f32.mrb[0].mxu0
      %v503 = vadd.f32 0.0, %v502
      %v504 = vpop.f32.mrb[0].mxu0
      %505 = vmatprep.mubr.f32.mxu0 0.0
      %506 = vmatmul.mubr.f32.gmra.mrb[0].mxu0 %v302
      %v507 = vpop.f32.mrb[0].mxu0
      %v508 = vadd.f32 0.0, %v507
      %v509 = vpop.f32.mrb[0].mxu0
      %510 = vmatprep.mubr.f32.mxu0 0.0
      %511 = vmatmul.mubr.f32.gmra.mrb[0].mxu0 %v305
      %v512 = vpop.f32.mrb[0].mxu0
      %v513 = vadd.f32 0.0, %v512
      %v514 = vpop.f32.mrb[0].mxu0
      %515 = vmatprep.mubr.f32.mxu0 0.0
      %516 = vmatmul.mubr.f32.gmra.mrb[0].mxu0 %v308
      %v517 = vpop.f32.mrb[0].mxu0
      %v518 = vadd.f32 0.0, %v517
      %v519 = vpop.f32.mrb[0].mxu0
      %520 = vmatprep.mubr.f32.mxu0 0.0
      %521 = vmatmul.mubr.f32.gmra.mrb[0].mxu0 %v311
      %v522 = vpop.f32.mrb[0].mxu0
      %v523 = vadd.f32 0.0, %v522
      %v524 = vpop.f32.mrb[0].mxu0
      %525 = vmatprep.mubr.f32.mxu0 0.0
      %526 = vmatmul.mubr.f32.gmra.mrb[0].mxu0 %v314
      %v527 = vpop.f32.mrb[0].mxu0
      %v528 = vadd.f32 0.0, %v527
      %v529 = vpop.f32.mrb[0].mxu0
      %530 = vmatprep.mubr.f32.mxu0 0.0
      %531 = vmatmul.mubr.f32.gmra.mrb[0].mxu0 %v317
      %v532 = vpop.f32.mrb[0].mxu0
      %v533 = vadd.f32 0.0, %v532
      %v534 = vpop.f32.mrb[0].mxu0
      %535 = vmatprep.mubr.f32.mxu0 0.0
      %536 = vmatmul.mubr.f32.gmra.mrb[0].mxu0 %v320
      %v537 = vpop.f32.mrb[0].mxu0
      %v538 = vadd.f32 0.0, %v537
      %v539 = vpop.f32.mrb[0].mxu0
      %540 = vmatprep.mubr.f32.mxu0 0.0
      %541 = vmatmul.mubr.f32.gmra.mrb[0].mxu0 %v323
      %v542 = vpop.f32.mrb[0].mxu0
      %v543 = vadd.f32 0.0, %v542
      %v544 = vpop.f32.mrb[0].mxu0
      %545 = vmatprep.mubr.f32.mxu0 0.0
      %546 = vmatmul.mubr.f32.gmra.mrb[0].mxu0 %v326
      %v547 = vpop.f32.mrb[0].mxu0
      %v548 = vadd.f32 0.0, %v547
      %v549 = vpop.f32.mrb[0].mxu0
      %550 = vmatprep.mubr.f32.mxu0 0.0
      %551 = vmatmul.mubr.f32.gmra.mrb[0].mxu0 %v329
      %v552 = vpop.f32.mrb[0].mxu0
      %v553 = vadd.f32 0.0, %v552
      %v554 = vpop.f32.mrb[0].mxu0
      %555 = vmatprep.mubr.f32.mxu0 0.0
      %556 = vmatmul.mubr.f32.gmra.mrb[0].mxu0 %v332
      %v557 = vpop.f32.mrb[0].mxu0
      %v558 = vadd.f32 0.0, %v557
      %v559 = vpop.f32.mrb[0].mxu0
      %560 = vmatprep.mubr.f32.mxu0 0.0
      %561 = vmatmul.mubr.f32.gmra.mrb[0].mxu0 %v335
      %v562 = vpop.f32.mrb[0].mxu0
      %v563 = vadd.f32 0.0, %v562
      %v564 = vpop.f32.mrb[0].mxu0
      %565 = vdwg.mxu0
      %v566 = vld [vmem:[%s2] sm:$0x1]
      %v568 = vlaneseq
      %v569 = vshrl.u32 %v568, 7
      %v570 = vsub.s32 0, %v569
      %v571 = vrot.slane %v566, %v570
      %v573 = vmul.f32 %v408, %v571
      %v574 = vmul.f32 %v413, %v571
      %v575 = vmul.f32 %v418, %v571
      %v576 = vmul.f32 %v423, %v571
      %v577 = vmul.f32 %v428, %v571
      %v578 = vmul.f32 %v433, %v571
      %v579 = vmul.f32 %v438, %v571
      %v580 = vmul.f32 %v443, %v571
      %v581 = vmul.f32 %v448, %v571
      %v582 = vmul.f32 %v453, %v571
      %v583 = vmul.f32 %v458, %v571
      %v584 = vmul.f32 %v463, %v571
      %v585 = vmul.f32 %v468, %v571
      %v586 = vmul.f32 %v473, %v571
      %v587 = vmul.f32 %v478, %v571
      %v588 = vmul.f32 %v483, %v571
      %v589 = vmul.f32 %v488, %v571
      %v590 = vmul.f32 %v493, %v571
      %v591 = vmul.f32 %v498, %v571
      %v592 = vmul.f32 %v503, %v571
      %v593 = vmul.f32 %v508, %v571
      %v594 = vmul.f32 %v513, %v571
      %v595 = vmul.f32 %v518, %v571
      %v596 = vmul.f32 %v523, %v571
      %v597 = vmul.f32 %v528, %v571
      %v598 = vmul.f32 %v533, %v571
      %v599 = vmul.f32 %v538, %v571
      %v600 = vmul.f32 %v543, %v571
      %v601 = vmul.f32 %v548, %v571
      %v602 = vmul.f32 %v553, %v571
      %v603 = vmul.f32 %v558, %v571
      %v604 = vmul.f32 %v563, %v571
      %v605 = vld [vmem:[%s3] sm:$0x1]
      %v607 = vlaneseq
      %v608 = vshrl.u32 %v607, 7
      %v609 = vsub.s32 0, %v608
      %v610 = vrot.slane %v605, %v609
      %v612 = vadd.f32 %v573, %v610
      %v613 = vadd.f32 %v574, %v610
      %v614 = vadd.f32 %v575, %v610
      %v615 = vadd.f32 %v576, %v610
      %v616 = vadd.f32 %v577, %v610
      %v617 = vadd.f32 %v578, %v610
      %v618 = vadd.f32 %v579, %v610
      %v619 = vadd.f32 %v580, %v610
      %v620 = vadd.f32 %v581, %v610
      %v621 = vadd.f32 %v582, %v610
      %v622 = vadd.f32 %v583, %v610
      %v623 = vadd.f32 %v584, %v610
      %v624 = vadd.f32 %v585, %v610
      %v625 = vadd.f32 %v586, %v610
      %v626 = vadd.f32 %v587, %v610
      %v627 = vadd.f32 %v588, %v610
      %v628 = vadd.f32 %v589, %v610
      %v629 = vadd.f32 %v590, %v610
      %v630 = vadd.f32 %v591, %v610
      %v631 = vadd.f32 %v592, %v610
      %v632 = vadd.f32 %v593, %v610
      %v633 = vadd.f32 %v594, %v610
      %v634 = vadd.f32 %v595, %v610
      %v635 = vadd.f32 %v596, %v610
      %v636 = vadd.f32 %v597, %v610
      %v637 = vadd.f32 %v598, %v610
      %v638 = vadd.f32 %v599, %v610
      %v639 = vadd.f32 %v600, %v610
      %v640 = vadd.f32 %v601, %v610
      %v641 = vadd.f32 %v602, %v610
      %v642 = vadd.f32 %v603, %v610
      %v643 = vadd.f32 %v604, %v610
      %v644 = vmax.f32 %v612, 0.0
      %v645 = vmax.f32 %v613, 0.0
      %v646 = vmax.f32 %v614, 0.0
      %v647 = vmax.f32 %v615, 0.0
      %v648 = vmax.f32 %v616, 0.0
      %v649 = vmax.f32 %v617, 0.0
      %v650 = vmax.f32 %v618, 0.0
      %v651 = vmax.f32 %v619, 0.0
      %v652 = vmax.f32 %v620, 0.0
      %v653 = vmax.f32 %v621, 0.0
      %v654 = vmax.f32 %v622, 0.0
      %v655 = vmax.f32 %v623, 0.0
      %v656 = vmax.f32 %v624, 0.0
      %v657 = vmax.f32 %v625, 0.0
      %v658 = vmax.f32 %v626, 0.0
      %v659 = vmax.f32 %v627, 0.0
      %v660 = vmax.f32 %v628, 0.0
      %v661 = vmax.f32 %v629, 0.0
      %v662 = vmax.f32 %v630, 0.0
      %v663 = vmax.f32 %v631, 0.0
      %v664 = vmax.f32 %v632, 0.0
      %v665 = vmax.f32 %v633, 0.0
      %v666 = vmax.f32 %v634, 0.0
      %v667 = vmax.f32 %v635, 0.0
      %v668 = vmax.f32 %v636, 0.0
      %v669 = vmax.f32 %v637, 0.0
      %v670 = vmax.f32 %v638, 0.0
      %v671 = vmax.f32 %v639, 0.0
      %v672 = vmax.f32 %v640, 0.0
      %v673 = vmax.f32 %v641, 0.0
      %v674 = vmax.f32 %v642, 0.0
      %v675 = vmax.f32 %v643, 0.0
      %vm676 = vcmask 130048
      %677 = vst.msk [vmem:[%s199] sm:$0xff] %vm676, %v644
      %678 = vst.msk [vmem:[%s199 + $0x8] sm:$0xff] %vm676, %v645
      %679 = vst.msk [vmem:[%s199 + $0x10] sm:$0xff] %vm676, %v646
      %680 = vst.msk [vmem:[%s199 + $0x18] sm:$0xff] %vm676, %v647
      %681 = vst.msk [vmem:[%s199 + $0x20] sm:$0xff] %vm676, %v648
      %682 = vst.msk [vmem:[%s199 + $0x28] sm:$0xff] %vm676, %v649
      %683 = vst.msk [vmem:[%s199 + $0x30] sm:$0xff] %vm676, %v650
      %684 = vst.msk [vmem:[%s199 + $0x38] sm:$0xff] %vm676, %v651
      %685 = vst.msk [vmem:[%s199 + $0x40] sm:$0xff] %vm676, %v652
      %686 = vst.msk [vmem:[%s199 + $0x48] sm:$0xff] %vm676, %v653
      %687 = vst.msk [vmem:[%s199 + $0x50] sm:$0xff] %vm676, %v654
      %688 = vst.msk [vmem:[%s199 + $0x58] sm:$0xff] %vm676, %v655
      %689 = vst.msk [vmem:[%s199 + $0x60] sm:$0xff] %vm676, %v656
      %690 = vst.msk [vmem:[%s199 + $0x68] sm:$0xff] %vm676, %v657
      %691 = vst.msk [vmem:[%s199 + $0x70] sm:$0xff] %vm676, %v658
      %692 = vst.msk [vmem:[%s199 + $0x78] sm:$0xff] %vm676, %v659
      %693 = vst.msk [vmem:[%s199 + $0x80] sm:$0xff] %vm676, %v660
      %694 = vst.msk [vmem:[%s199 + $0x88] sm:$0xff] %vm676, %v661
      %695 = vst.msk [vmem:[%s199 + $0x90] sm:$0xff] %vm676, %v662
      %696 = vst.msk [vmem:[%s199 + $0x98] sm:$0xff] %vm676, %v663
      %697 = vst.msk [vmem:[%s199 + $0xa0] sm:$0xff] %vm676, %v664
      %698 = vst.msk [vmem:[%s199 + $0xa8] sm:$0xff] %vm676, %v665
      %699 = vst.msk [vmem:[%s199 + $0xb0] sm:$0xff] %vm676, %v666
      %700 = vst.msk [vmem:[%s199 + $0xb8] sm:$0xff] %vm676, %v667
      %701 = vst.msk [vmem:[%s199 + $0xc0] sm:$0xff] %vm676, %v668
      %702 = vst.msk [vmem:[%s199 + $0xc8] sm:$0xff] %vm676, %v669
      %703 = vst.msk [vmem:[%s199 + $0xd0] sm:$0xff] %vm676, %v670
      %704 = vst.msk [vmem:[%s199 + $0xd8] sm:$0xff] %vm676, %v671
      %705 = vst.msk [vmem:[%s199 + $0xe0] sm:$0xff] %vm676, %v672
      %706 = vst.msk [vmem:[%s199 + $0xe8] sm:$0xff] %vm676, %v673
      %707 = vst.msk [vmem:[%s199 + $0xf0] sm:$0xff] %vm676, %v674
      %708 = vst.msk [vmem:[%s199 + $0xf8] sm:$0xff] %vm676, %v675
      %s709 = smul.u32 32, %s15
      %p710 = scmp.lt.s32.totalorder %s709, 191
      %s711 = scalar_select %p710, %s709, 191
      %s712 = smul.addr %s711, 8
      %s713 = scalar_lea.vmem %s4, %s712
      // Predicated region
      $region37: #{tpu_custom_call.1} parent=35 // pred_check
        %p714 = pneg %p122
      $region38: #{tpu_custom_call.1} parent=35 // pred_check_branch
        %716 = sbr.rel (%p714) target = $region40
      $region39: #{tpu_custom_call.1} parent=35 // pred_region
        %s717 = smul.u32 32, %s15
      $region40: #{tpu_custom_call.1} parent=35 // pred_fallthru
        _
    $region36: #{tpu_custom_call.1} parent=5 // pred_fallthru
      _
    %p718 = scmp.le.s32.totalorder 2, %s10
    // Predicated region
    $region41: #{tpu_custom_call.1} parent=5 // pred_check
      %p719 = pneg %p718
    $region42: #{tpu_custom_call.1} parent=5 // pred_check_branch
      %721 = sbr.rel (%p719) target = $region44
    $region43: #{tpu_custom_call.1} parent=5 // pred_region
      %s722 = ssub.s32 %s10, 2
      // Predicated region
      $region45: #{tpu_custom_call.1} parent=43 // pred_check
        %p723 = pneg %p128
      $region46: #{tpu_custom_call.1} parent=43 // pred_check_branch
        %725 = sbr.rel (%p723) target = $region48
      $region47: #{tpu_custom_call.1} parent=43 // pred_region
        %s726 = smul.u32 32, %s16
        %p727 = scmp.lt.s32.totalorder %s726, 191
        %s728 = scalar_select %p727, %s726, 191
        %s729 = smul.addr %s728, 8
        %s730 = scalar_lea.vmem %s4, %s729
      $region48: #{tpu_custom_call.1} parent=43 // pred_fallthru
        _
    $region44: #{tpu_custom_call.1} parent=5 // pred_fallthru
      _
  $region6: #{tpu_custom_call.1} parent=0 // loop_footer
    %s14 = sadd.s32 1, %s10
  $region7: #{tpu_custom_call.1} parent=0 // loop_footer_branch
    %9 = sbr.rel target = $region3
  $region8: #{tpu_custom_call.1} parent=0 // loop_exit
    _

</llo_original>
